<compile_context>
chip_gen: v6e
topology: v6e:2x2x1
jax: 0.10.0
libtpu: 0.0.40
codegen_flags: <defaults>
</compile_context>

<pallas_src>
import functools

import numpy as np
import jax
import jax.numpy as jnp
from jax import lax
from jax.experimental import pallas as pl
from jax.experimental.pallas import tpu as pltpu

GROWTH = 32
BN_SIZE = 4
BLOCK_CONFIG = (6, 12, 48, 32)
INIT_FEATURES = 64
NUM_CLASSES = 1000

_EP_NPARAMS = {"none": 0, "affine_relu": 2, "bias_logsoftmax0": 1}


def _round_up(x, m):
  return (x + m - 1) // m * m


def _pick_div(dim, candidates):
  for c in candidates:
    if c <= dim and dim % c == 0:
      return c
  return min(dim, 128)


# ---------------------------------------------------------------------------
# Pallas kernels
# ---------------------------------------------------------------------------
def _make_gemm_kernel(a_affine, epilogue, multi_k, out_dtype):
  """out = epilogue([relu(A*s+t)] @ B); bf16 operands, f32 MXU accumulation."""

  def _finish(acc, ep_refs):
    if epilogue == "affine_relu":
      es, et = ep_refs
      return jnp.maximum(acc * es[...] + et[...], 0.0).astype(out_dtype)
    if epilogue == "bias_logsoftmax0":
      (bias,) = ep_refs
      z = acc + bias[...]                       # Linear bias
      m = jnp.max(z, axis=0, keepdims=True)     # log_softmax over dim=0 (batch axis)
      s = jnp.sum(jnp.exp(z - m), axis=0, keepdims=True)
      return ((z - m) - jnp.log(s)).astype(out_dtype)
    return acc.astype(out_dtype)

  def kernel(*refs):
    idx = 0
    a_ref = refs[idx]; idx += 1
    if a_affine:
      s_ref, t_ref = refs[idx], refs[idx + 1]; idx += 2
    b_ref = refs[idx]; idx += 1
    n_ep = _EP_NPARAMS[epilogue]
    ep_refs = refs[idx:idx + n_ep]; idx += n_ep
    o_ref = refs[idx]; idx += 1
    acc_ref = refs[idx] if multi_k else None

    a = a_ref[...]
    if a_affine:
      # Fused BatchNorm affine + ReLU on the LHS.  Exact because no zero padding is
      # inserted between the BN and this conv, and padded K rows have s=t=w=0 so
      # relu(0)=0 rows contribute nothing.  (BN is never folded into weights here,
      # which would be wrong with the interposed ReLU.)
      a = jnp.maximum(a * s_ref[...] + t_ref[...], 0).astype(a_ref.dtype)
    prod = jnp.dot(a, b_ref[...], preferred_element_type=jnp.float32)

    if multi_k:
      k = pl.program_id(2)

      @pl.when(k == 0)
      def _():
        acc_ref[...] = prod        # first K step: direct store, no zero-init pass

      @pl.when(k > 0)
      def _():
        acc_ref[...] += prod

      @pl.when(k == pl.num_programs(2) - 1)
      def _():
        o_ref[...] = _finish(acc_ref[...], ep_refs)
    else:
      o_ref[...] = _finish(prod, ep_refs)

  return kernel


@functools.lru_cache(maxsize=None)
def _gemm_call(Mp, Kp, Np, tm, tk, tn, a_affine, epilogue, out_dtype_name):
  out_dtype = jnp.dtype(out_dtype_name)
  multi_k = (Kp // tk) > 1
  kernel = _make_gemm_kernel(a_affine, epilogue, multi_k, out_dtype)
  in_specs = [pl.BlockSpec((tm, tk), lambda i, j, k: (i, k))]       # A (resident per i)
  if a_affine:
    in_specs += [pl.BlockSpec((1, tk), lambda i, j, k: (0, k))] * 2  # BN scale/shift
  in_specs += [pl.BlockSpec((tk, tn), lambda i, j, k: (k, j))]       # weights
  in_specs += [pl.BlockSpec((1, tn), lambda i, j, k: (0, j))] * _EP_NPARAMS[epilogue]
  scratch = [pltpu.VMEM((tm, tn), jnp.float32)] if multi_k else []
  return pl.pallas_call(
      kernel,
      out_shape=jax.ShapeDtypeStruct((Mp, Np), out_dtype),
      grid=(Mp // tm, Np // tn, Kp // tk),
      in_specs=in_specs,
      out_specs=pl.BlockSpec((tm, tn), lambda i, j, k: (i, j)),
      scratch_shapes=scratch,
      compiler_params=pltpu.CompilerParams(
          dimension_semantics=("parallel", "parallel", "arbitrary")),
  )


def _gemm(a, b, *, affine=None, epilogue=None, out_dtype=jnp.bfloat16):
  """epilogue([relu(a[:, :Kp]*s+t)] @ b).

  a: (M, >=Kp) bf16 -- trailing columns of `a` beyond Kp are simply never read
     (the K grid only covers b.shape[0] columns), so no prefix-slice copy is needed.
  b: (Kp, Np) bf16, Kp/Np multiples of 128.
  """
  M = a.shape[0]
  Kp, Np = b.shape
  assert a.shape[1] >= Kp
  ep_kind, extra = "none", []
  if epilogue is not None:
    ep_kind, extra = epilogue[0], list(epilogue[1:])

  if M <= 512:
    Mp, tm = M, M
  else:                                   # large-resolution path: tile + pad M
    tm = 256
    Mp = _round_up(M, tm)
    a = jnp.pad(a, ((0, Mp - M), (0, 0)))
  if ep_kind == "bias_logsoftmax0":
    assert Mp == M and tm == M            # dim=0 softmax needs the whole batch in one tile

  tn = _pick_div(Np, (1024, 896, 768, 640, 512, 384, 256, 128))
  tk = Kp                                 # single K step when operands fit VMEM budget
  vmem_est = 2 * 2 * (tm * tk + tk * tn + tm * tn) + 4 * tm * tn
  if vmem_est > (12 << 20):
    tk = _pick_div(Kp, (1024, 896, 768, 640, 512, 384, 256, 128))

  args = [a]
  if affine is not None:
    args += [affine[0], affine[1]]
  args += [b] + extra
  out = _gemm_call(Mp, Kp, Np, tm, tk, tn, affine is not None, ep_kind,
                   jnp.dtype(out_dtype).name)(*args)
  return out[:M] if Mp != M else out


def _bn_relu_kernel(x_ref, s_ref, t_ref, o_ref):
  o_ref[...] = jnp.maximum(x_ref[...] * s_ref[...] + t_ref[...], 0).astype(o_ref.dtype)


@functools.lru_cache(maxsize=None)
def _bn_relu_call(M, C):
  # C is always a multiple of 128 here (lane-dense stores); called once per forward.
  return pl.pallas_call(
      _bn_relu_kernel, out_shape=jax.ShapeDtypeStruct((M, C), jnp.bfloat16))


def _bn_relu(x, s, t):
  return _bn_relu_call(x.shape[0], x.shape[1])(x, s, t)


# ---------------------------------------------------------------------------
# Plain-JAX glue (runs inside the jit): patch extraction, pooling
# ---------------------------------------------------------------------------
def _im2col(x, kh, kw, stride, pad):
  """x: (B,H,W,C) NHWC -> (B*OH*OW, kh*kw*C); patch order (fh, fw, c), c fastest."""
  B, H, W, C = x.shape
  if pad > 0:
    x = jnp.pad(x, ((0, 0), (pad, pad), (pad, pad), (0, 0)))
  OH = (H + 2 * pad - kh) // stride + 1
  OW = (W + 2 * pad - kw) // stride + 1
  if kh == 1 and kw == 1 and stride == 1:
    return x.reshape(B * OH * OW, C), OH, OW
  patches = [x[:, i:i + stride * OH:stride, j:j + stride * OW:stride, :]
             for i in range(kh) for j in range(kw)]
  cols = jnp.stack(patches, axis=3)              # (B, OH, OW, kh*kw, C)
  return cols.reshape(B * OH * OW, kh * kw * C), OH, OW


# ---------------------------------------------------------------------------
# Deterministic synthetic parameters (shapes of torchvision densenet201)
# ---------------------------------------------------------------------------
def _he(rng, shape, fan_in):
  return (rng.standard_normal(shape) * np.sqrt(2.0 / fan_in)).astype(np.float32)


def _bn_affine(rng, c):
  gamma = (1.0 + 0.01 * rng.standard_normal(c)).astype(np.float32)
  beta = (0.01 * rng.standard_normal(c)).astype(np.float32)
  scale = (gamma / np.sqrt(1.0 + 1e-5)).astype(np.float32)   # running stats ~ (0, 1)
  shift = beta
  return scale, shift


def build_densenet201(seed=0):
  rng = np.random.default_rng(seed)
  bf = jnp.bfloat16
  p = {}

  # stem: conv0 7x7/2 (3->64); norm0+relu0 fused as the GEMM epilogue.
  w0 = _he(rng, (7, 7, 3, 64), 147)                         # HWIO (matches im2col order)
  w0m = np.zeros((256, 128), np.float32); w0m[:147, :64] = w0.reshape(147, 64)
  s0, t0 = _bn_affine(rng, 64)
  es0 = np.zeros((1, 128), np.float32); es0[0, :64] = s0
  et0 = np.zeros((1, 128), np.float32); et0[0, :64] = t0
  p['conv0_w'] = jnp.asarray(w0m, bf)
  p['conv0_es'] = jnp.asarray(es0)
  p['conv0_et'] = jnp.asarray(et0)
  aux = {'conv0_w_hwio': jnp.asarray(w0)}

  num_f = INIT_FEATURES
  blocks, trans = [], []
  for bi, n_layers in enumerate(BLOCK_CONFIG):
    layers = []
    for li in range(n_layers):
      c_in = num_f + li * GROWTH
      Kp = _round_up(c_in, 128)
      s1, t1 = _bn_affine(rng, c_in)                        # norm1 (fused on LHS)
      s1p = np.zeros((1, Kp), np.float32); s1p[0, :c_in] = s1
      t1p = np.zeros((1, Kp), np.float32); t1p[0, :c_in] = t1
      w1 = _he(rng, (c_in, 128), c_in)                      # conv1 1x1, c_in -> 128
      w1p = np.zeros((Kp, 128), np.float32); w1p[:c_in] = w1
      s2, t2 = _bn_affine(rng, 128)                         # norm2 (fused epilogue)
      w2 = _he(rng, (3, 3, 128, GROWTH), 9 * 128).reshape(9 * 128, GROWTH)
      w2p = np.zeros((9 * 128, 128), np.float32); w2p[:, :GROWTH] = w2
      layers.append(dict(
          s1=jnp.asarray(s1p, bf), t1=jnp.asarray(t1p, bf), w1=jnp.asarray(w1p, bf),
          es2=jnp.asarray(s2.reshape(1, 128)), et2=jnp.asarray(t2.reshape(1, 128)),
          w2=jnp.asarray(w2p, bf)))
    blocks.append(layers)
    num_f += n_layers * GROWTH
    if bi != len(BLOCK_CONFIG) - 1:                         # transition: BN+ReLU+1x1+avgpool
      st, tt = _bn_affine(rng, num_f)
      wt = _he(rng, (num_f, num_f // 2), num_f)
      trans.append(dict(s=jnp.asarray(st.reshape(1, -1), bf),
                        t=jnp.asarray(tt.reshape(1, -1), bf),
                        w=jnp.asarray(wt, bf)))
      num_f //= 2
  p['blocks'], p['trans'] = blocks, trans

  s5, t5 = _bn_affine(rng, num_f)                           # norm5 (num_f == 1920)
  p['n5_s'] = jnp.asarray(s5.reshape(1, -1), bf)
  p['n5_t'] = jnp.asarray(t5.reshape(1, -1), bf)

  wc = (rng.standard_normal((num_f, NUM_CLASSES)) / np.sqrt(num_f)).astype(np.float32)
  wcp = np.zeros((num_f, 1024), np.float32); wcp[:, :NUM_CLASSES] = wc
  bc = np.zeros((1, 1024), np.float32)
  bc[0, :NUM_CLASSES] = 0.01 * rng.standard_normal(NUM_CLASSES)
  p['cls_w'] = jnp.asarray(wcp, bf)
  p['cls_b'] = jnp.asarray(bc)
  # NOTE: the module's `self.model.fc = nn.Linear(2048, 120)` is never used in forward.
  return p, aux


# ---------------------------------------------------------------------------
# Forward pass
# ---------------------------------------------------------------------------
def forward(x_nchw, p):
  x = jnp.transpose(x_nchw, (0, 2, 3, 1)).astype(jnp.bfloat16)     # NHWC, bf16
  B = x.shape[0]

  # --- stem: conv0 7x7/2 (+ fused norm0 + relu0 epilogue) -> maxpool 3x3/2 ---
  cols, H, W = _im2col(x, 7, 7, 2, 3)
  cols = jnp.pad(cols, ((0, 0), (0, p['conv0_w'].shape[0] - cols.shape[1])))
  y = _gemm(cols, p['conv0_w'],
            epilogue=('affine_relu', p['conv0_es'], p['conv0_et']))
  y = y[:, :INIT_FEATURES].reshape(B, H, W, INIT_FEATURES)
  # pool0: maxpool 3x3/2 pad 1 (inputs are post-ReLU >= 0, so 0 is a valid identity)
  y = lax.reduce_window(y, jnp.array(0, y.dtype), lax.max,
                        (1, 3, 3, 1), (1, 2, 2, 1), ((0, 0), (1, 1), (1, 1), (0, 0)))
  _, H, W, C = y.shape
  feat = y.reshape(B * H * W, C)
  num_f = INIT_FEATURES

  for bi, n_layers in enumerate(BLOCK_CONFIG):
    c_total = num_f + n_layers * GROWTH          # always a multiple of 128
    # Preallocated full-width dense-block feature buffer: each layer writes its 32
    # new channels in place; no O(L^2) concatenation.  Unwritten channels are zero
    # and their BN scale / weight rows are zero, so they are inert for every reader.
    buf = jnp.pad(feat, ((0, 0), (0, c_total - num_f)))
    for li, layer in enumerate(p['blocks'][bi]):
      c_in = num_f + li * GROWTH
      # norm1+relu fused on the GEMM LHS, 1x1 conv on the MXU, norm2+relu fused as
      # the epilogue; the K grid only covers round_up(c_in, 128) columns of `buf`.
      bott = _gemm(buf, layer['w1'], affine=(layer['s1'], layer['t1']),
                   epilogue=('affine_relu', layer['es2'], layer['et2']))
      # conv2: 3x3/1 pad 1 on the 128-channel bottleneck (im2col glue + plain GEMM).
      cols, _, _ = _im2col(bott.reshape(B, H, W, BN_SIZE * GROWTH), 3, 3, 1, 1)
      y_new = _gemm(cols, layer['w2'])[:, :GROWTH]
      buf = lax.dynamic_update_slice(buf, y_new, (0, c_in))
    feat = buf
    num_f = c_total
    if bi != len(BLOCK_CONFIG) - 1:
      tr = p['trans'][bi]
      z = _gemm(feat, tr['w'], affine=(tr['s'], tr['t']))   # BN+ReLU+conv1x1 fused
      C2 = num_f // 2
      z = z.reshape(B, H, W, C2)
      z = z.reshape(B, H // 2, 2, W // 2, 2, C2).mean(axis=(2, 4), dtype=jnp.float32)
      H, W = H // 2, W // 2
      feat = z.astype(jnp.bfloat16).reshape(B * H * W, C2)
      num_f = C2

  # norm5 + final ReLU, global average pool, classifier (+bias) + log_softmax(dim=0).
  feat = _bn_relu(feat, p['n5_s'], p['n5_t'])
  pooled = feat.reshape(B, H * W, num_f).mean(axis=1, dtype=jnp.float32)
  logits = _gemm(pooled.astype(jnp.bfloat16), p['cls_w'],
                 epilogue=('bias_logsoftmax0', p['cls_b']), out_dtype=jnp.float32)
  return logits[:, :NUM_CLASSES]


# ---------------------------------------------------------------------------
if __name__ == "__main__":
  params, aux = build_densenet201(seed=0)

  key = jax.random.PRNGKey(0)
  x = jax.random.normal(key, (2, 3, 32, 32), dtype=jnp.float32)    # NCHW, like PyTorch

  # Sanity-check the Pallas im2col+GEMM conv lowering against XLA's conv on the stem
  # (both sides bf16 inputs with f32 accumulation).
  x_nhwc = jnp.transpose(x, (0, 2, 3, 1)).astype(jnp.bfloat16)
  cols0, OH, OW = _im2col(x_nhwc, 7, 7, 2, 3)
  cols0 = jnp.pad(cols0, ((0, 0), (0, params['conv0_w'].shape[0] - cols0.shape[1])))
  got = _gemm(cols0, params['conv0_w'], out_dtype=jnp.float32)[:, :INIT_FEATURES]
  got = got.reshape(2, OH, OW, INIT_FEATURES)
  ref = lax.conv_general_dilated(
      x_nhwc, aux['conv0_w_hwio'].astype(jnp.bfloat16),
      window_strides=(2, 2), padding=((3, 3), (3, 3)),
      dimension_numbers=('NHWC', 'HWIO', 'NHWC'),
      preferred_element_type=jnp.float32)
  np.testing.assert_allclose(np.asarray(got), np.asarray(ref), rtol=0.1, atol=0.1)

  fwd = jax.jit(forward)
  out = jax.block_until_ready(fwd(x, params))
  assert out.shape == (2, NUM_CLASSES), out.shape
  assert bool(jnp.all(jnp.isfinite(out)))
  # log_softmax over dim=0  =>  exp(out) sums to 1 along the batch axis.
  colsum = jnp.sum(jnp.exp(out.astype(jnp.float32)), axis=0)
  assert bool(jnp.allclose(colsum, 1.0, atol=1e-3))
  print("KERNEL_OK")
</pallas_src>

<mosaic_0001>
module attributes {stable_mosaic.version = 11 : i64} {
  func.func @kernel(%arg0: i32, %arg1: i32, %arg2: i32, %arg3: memref<512x256xbf16, #tpu.memory_space<vmem>>, %arg4: memref<256x128xbf16, #tpu.memory_space<vmem>>, %arg5: memref<512x128xf32, #tpu.memory_space<vmem>>) attributes {dimension_semantics = [#tpu.dimension_semantics<parallel>, #tpu.dimension_semantics<parallel>, #tpu.dimension_semantics<arbitrary>], iteration_bounds = array<i64: 1, 1, 1>, scalar_prefetch = 0 : i64, scratch_operands = 0 : i64, tpu.core_type = #tpu.core_type<tc>, window_params = [{transform_indices = @transform_0, window_bounds = array<i64: 512, 256>}, {transform_indices = @transform_1, window_bounds = array<i64: 256, 128>}, {transform_indices = @transform_2, window_bounds = array<i64: 512, 128>}]} {
    %c0 = arith.constant 0 : index
    %c0_0 = arith.constant 0 : index
    %0 = vector.load %arg3[%c0, %c0_0] : memref<512x256xbf16, #tpu.memory_space<vmem>>, vector<512x256xbf16>
    %c0_1 = arith.constant 0 : index
    %c0_2 = arith.constant 0 : index
    %1 = vector.load %arg4[%c0_1, %c0_2] : memref<256x128xbf16, #tpu.memory_space<vmem>>, vector<256x128xbf16>
    %cst = arith.constant dense<0.000000e+00> : vector<512x128xf32>
    %2 = tpu.matmul %0, %1, %cst {dimension_numbers = #tpu.dot_dimension_numbers<[1], [0], [0], [1], [0, 0, 1, 1], [], []>} : vector<512x256xbf16>, vector<256x128xbf16>, vector<512x128xf32> -> vector<512x128xf32>
    %c0_3 = arith.constant 0 : index
    %c0_4 = arith.constant 0 : index
    %3 = vector.load %arg5[%c0_3, %c0_4] : memref<512x128xf32, #tpu.memory_space<vmem>>, vector<512x128xf32>
    tpu.vector_store %arg5[%c0_3, %c0_4], %2 {strides = array<i32>} : memref<512x128xf32, #tpu.memory_space<vmem>>, vector<512x128xf32>,
    return
  }
  func.func @transform_0(%arg0: i32, %arg1: i32, %arg2: i32) -> (i32, i32) {
    %c0_i32 = arith.constant 0 : i32
    return %arg0, %arg2 : i32, i32
  }
  func.func @transform_1(%arg0: i32, %arg1: i32, %arg2: i32) -> (i32, i32) {
    %c0_i32 = arith.constant 0 : i32
    return %arg2, %arg1 : i32, i32
  }
  func.func @transform_2(%arg0: i32, %arg1: i32, %arg2: i32) -> (i32, i32) {
    %c0_i32 = arith.constant 0 : i32
    return %arg0, %arg1 : i32, i32
  }
}

</mosaic_0001>

<llo_original>
// kernel: tpu_custom_call.1
$region0: #{tpu_custom_call.1}
  #allocation0 [shape = 'u32[]', space=smem, size = 0x4, offset = 0x4, fixed_abs, tag = 'smem constant byte address 0x4 - core index']
  #allocation1 [shape = 'u32[144,128]{1,0:T(1,128)}', space=vmem, size = 0x12000, scoped, tag = 'internal scratch']
  %s0 = inlined_call_operand.hbm [shape: bf16[512,256], index: 0, kind: input, shape index: {}]
  %s1 = inlined_call_operand.hbm [shape: bf16[256,128], index: 1, kind: input, shape index: {}]
  %s2 = inlined_call_operand.hbm [shape: f32[512,128], index: 2, kind: output, shape index: {}]
  %s3 = sld [smem:[#allocation0]]
  $region26: #{tpu_custom_call.1} parent=0
    _
  %s5 = ssub.s32 1, %s3
  %s6 = scalar_select 0, %s5, %s3
  $region1: #{tpu_custom_call.1} parent=0
    #allocation2 [shape = 'u8[262144]{0}', space=vmem, size = 0x40000, scoped, tag = 'input window, operand 0, single buffered']
    #allocation3 [shape = 's32[1]{0}', space=sflag, size = 0x4, scoped, tag = 'scoped memory for tpu_custom_call.1']
    #allocation4 [shape = 's32[1]{0}', space=sflag, size = 0x4, scoped, tag = 'scoped memory for tpu_custom_call.1']
    #allocation5 [shape = 'u8[65536]{0}', space=vmem, size = 0x10000, scoped, tag = 'input window, operand 1, single buffered']
    #allocation6 [shape = 's32[1]{0}', space=sflag, size = 0x4, scoped, tag = 'scoped memory for tpu_custom_call.1']
    #allocation7 [shape = 'u8[262144]{0}', space=vmem, size = 0x40000, scoped, tag = 'output window, operand 0, single buffered']
    %7 = vsyncpa [#allocation3], 0
    %8 = vsyncpa [#allocation6], 0
    %9 = vsyncpa [#allocation4], 0
    // Predicated region
    $region2: #{tpu_custom_call.1} parent=1 // pred_check
      _
    $region3: #{tpu_custom_call.1} parent=1 // pred_check_branch
      %11 = sbr.rel (0) target = $region5
    $region4: #{tpu_custom_call.1} parent=1 // pred_region
      %s13 = ssub.s32 8192, 8192
      %14 = vsyncadd [#allocation3], %s13
      %s15 = sshll.u32 [#allocation2], 4
      %s16 = int_to_ptr.vmem [resolvable:$true] %s15
      %21 = dma.hbm_to_vmem [thread:$0]  %s0, 8192, %s16, [#allocation3], 128, 128, 8
    $region5: #{tpu_custom_call.1} parent=1 // pred_fallthru
      _
    // Predicated region
    $region6: #{tpu_custom_call.1} parent=1 // pred_check
      _
    $region7: #{tpu_custom_call.1} parent=1 // pred_check_branch
      %23 = sbr.rel (0) target = $region9
    $region8: #{tpu_custom_call.1} parent=1 // pred_region
      %s25 = ssub.s32 2048, 2048
      %26 = vsyncadd [#allocation6], %s25
      %s27 = sshll.u32 [#allocation5], 4
      %s28 = int_to_ptr.vmem [resolvable:$true] %s27
      %33 = dma.hbm_to_vmem [thread:$0]  %s1, 2048, %s28, [#allocation6], 64, 64, 4
    $region9: #{tpu_custom_call.1} parent=1 // pred_fallthru
      _
    // Predicated region
    $region10: #{tpu_custom_call.1} parent=1 // pred_check
      _
    $region11: #{tpu_custom_call.1} parent=1 // pred_check_branch
      %35 = sbr.rel (0) target = $region13
    $region12: #{tpu_custom_call.1} parent=1 // pred_region
      %36 = dma.done [#allocation3], 8192
    $region13: #{tpu_custom_call.1} parent=1 // pred_fallthru
      _
    // Predicated region
    $region14: #{tpu_custom_call.1} parent=1 // pred_check
      _
    $region15: #{tpu_custom_call.1} parent=1 // pred_check_branch
      %38 = sbr.rel (0) target = $region17
    $region16: #{tpu_custom_call.1} parent=1 // pred_region
      %39 = dma.done [#allocation6], 2048
    $region17: #{tpu_custom_call.1} parent=1 // pred_fallthru
      _
    %v41 = vld [vmem:[#allocation2] sm:$0xff]
    %v42 = vld [vmem:[#allocation2 + $0x8] sm:$0xff]
    %v43 = vld [vmem:[#allocation2 + $0x10] sm:$0xff]
    %v44 = vld [vmem:[#allocation2 + $0x18] sm:$0xff]
    %v45 = vld [vmem:[#allocation2 + $0x20] sm:$0xff]
    %v46 = vld [vmem:[#allocation2 + $0x28] sm:$0xff]
    %v47 = vld [vmem:[#allocation2 + $0x30] sm:$0xff]
    %v48 = vld [vmem:[#allocation2 + $0x38] sm:$0xff]
    %v49 = vld [vmem:[#allocation2 + $0x40] sm:$0xff]
    %v50 = vld [vmem:[#allocation2 + $0x48] sm:$0xff]
    %v51 = vld [vmem:[#allocation2 + $0x50] sm:$0xff]
    %v52 = vld [vmem:[#allocation2 + $0x58] sm:$0xff]
    %v53 = vld [vmem:[#allocation2 + $0x60] sm:$0xff]
    %v54 = vld [vmem:[#allocation2 + $0x68] sm:$0xff]
    %v55 = vld [vmem:[#allocation2 + $0x70] sm:$0xff]
    %v56 = vld [vmem:[#allocation2 + $0x78] sm:$0xff]
    %v57 = vld [vmem:[#allocation2 + $0x80] sm:$0xff]
    %v58 = vld [vmem:[#allocation2 + $0x88] sm:$0xff]
    %v59 = vld [vmem:[#allocation2 + $0x90] sm:$0xff]
    %v60 = vld [vmem:[#allocation2 + $0x98] sm:$0xff]
    %v61 = vld [vmem:[#allocation2 + $0xa0] sm:$0xff]
    %v62 = vld [vmem:[#allocation2 + $0xa8] sm:$0xff]
    %v63 = vld [vmem:[#allocation2 + $0xb0] sm:$0xff]
    %v64 = vld [vmem:[#allocation2 + $0xb8] sm:$0xff]
    %v65 = vld [vmem:[#allocation2 + $0xc0] sm:$0xff]
    %v66 = vld [vmem:[#allocation2 + $0xc8] sm:$0xff]
    %v67 = vld [vmem:[#allocation2 + $0xd0] sm:$0xff]
    %v68 = vld [vmem:[#allocation2 + $0xd8] sm:$0xff]
    %v69 = vld [vmem:[#allocation2 + $0xe0] sm:$0xff]
    %v70 = vld [vmem:[#allocation2 + $0xe8] sm:$0xff]
    %v71 = vld [vmem:[#allocation2 + $0xf0] sm:$0xff]
    %v72 = vld [vmem:[#allocation2 + $0xf8] sm:$0xff]
    %v73 = vld [vmem:[#allocation2 + $0x100] sm:$0xff]
    %v74 = vld [vmem:[#allocation2 + $0x108] sm:$0xff]
    %v75 = vld [vmem:[#allocation2 + $0x110] sm:$0xff]
    %v76 = vld [vmem:[#allocation2 + $0x118] sm:$0xff]
    %v77 = vld [vmem:[#allocation2 + $0x120] sm:$0xff]
    %v78 = vld [vmem:[#allocation2 + $0x128] sm:$0xff]
    %v79 = vld [vmem:[#allocation2 + $0x130] sm:$0xff]
    %v80 = vld [vmem:[#allocation2 + $0x138] sm:$0xff]
    %v81 = vld [vmem:[#allocation2 + $0x140] sm:$0xff]
    %v82 = vld [vmem:[#allocation2 + $0x148] sm:$0xff]
    %v83 = vld [vmem:[#allocation2 + $0x150] sm:$0xff]
    %v84 = vld [vmem:[#allocation2 + $0x158] sm:$0xff]
    %v85 = vld [vmem:[#allocation2 + $0x160] sm:$0xff]
    %v86 = vld [vmem:[#allocation2 + $0x168] sm:$0xff]
    %v87 = vld [vmem:[#allocation2 + $0x170] sm:$0xff]
    %v88 = vld [vmem:[#allocation2 + $0x178] sm:$0xff]
    %v89 = vld [vmem:[#allocation2 + $0x180] sm:$0xff]
    %v90 = vld [vmem:[#allocation2 + $0x188] sm:$0xff]
    %v91 = vld [vmem:[#allocation2 + $0x190] sm:$0xff]
    %v92 = vld [vmem:[#allocation2 + $0x198] sm:$0xff]
    %v93 = vld [vmem:[#allocation2 + $0x1a0] sm:$0xff]
    %v94 = vld [vmem:[#allocation2 + $0x1a8] sm:$0xff]
    %v95 = vld [vmem:[#allocation2 + $0x1b0] sm:$0xff]
    %v96 = vld [vmem:[#allocation2 + $0x1b8] sm:$0xff]
    %v97 = vld [vmem:[#allocation2 + $0x1c0] sm:$0xff]
    %v98 = vld [vmem:[#allocation2 + $0x1c8] sm:$0xff]
    %v99 = vld [vmem:[#allocation2 + $0x1d0] sm:$0xff]
    %v100 = vld [vmem:[#allocation2 + $0x1d8] sm:$0xff]
    %v101 = vld [vmem:[#allocation2 + $0x1e0] sm:$0xff]
    %v102 = vld [vmem:[#allocation2 + $0x1e8] sm:$0xff]
    %v103 = vld [vmem:[#allocation2 + $0x1f0] sm:$0xff]
    %v104 = vld [vmem:[#allocation2 + $0x1f8] sm:$0xff]
    %v105 = vld [vmem:[#allocation5] sm:$0xf]
    %v106 = vld [vmem:[#allocation5 + $0x4] sm:$0xf]
    %v107 = vld [vmem:[#allocation5 + $0x8] sm:$0xf]
    %v108 = vld [vmem:[#allocation5 + $0xc] sm:$0xf]
    %v109 = vld [vmem:[#allocation5 + $0x10] sm:$0xf]
    %v110 = vld [vmem:[#allocation5 + $0x14] sm:$0xf]
    %v111 = vld [vmem:[#allocation5 + $0x18] sm:$0xf]
    %v112 = vld [vmem:[#allocation5 + $0x1c] sm:$0xf]
    %v113 = vld [vmem:[#allocation5 + $0x20] sm:$0xf]
    %v114 = vld [vmem:[#allocation5 + $0x24] sm:$0xf]
    %v115 = vld [vmem:[#allocation5 + $0x28] sm:$0xf]
    %v116 = vld [vmem:[#allocation5 + $0x2c] sm:$0xf]
    %v117 = vld [vmem:[#allocation5 + $0x30] sm:$0xf]
    %v118 = vld [vmem:[#allocation5 + $0x34] sm:$0xf]
    %v119 = vld [vmem:[#allocation5 + $0x38] sm:$0xf]
    %v120 = vld [vmem:[#allocation5 + $0x3c] sm:$0xf]
    %v121 = vld [vmem:[#allocation5 + $0x40] sm:$0xf]
    %v122 = vld [vmem:[#allocation5 + $0x44] sm:$0xf]
    %v123 = vld [vmem:[#allocation5 + $0x48] sm:$0xf]
    %v124 = vld [vmem:[#allocation5 + $0x4c] sm:$0xf]
    %v125 = vld [vmem:[#allocation5 + $0x50] sm:$0xf]
    %v126 = vld [vmem:[#allocation5 + $0x54] sm:$0xf]
    %v127 = vld [vmem:[#allocation5 + $0x58] sm:$0xf]
    %v128 = vld [vmem:[#allocation5 + $0x5c] sm:$0xf]
    %v129 = vld [vmem:[#allocation5 + $0x60] sm:$0xf]
    %v130 = vld [vmem:[#allocation5 + $0x64] sm:$0xf]
    %v131 = vld [vmem:[#allocation5 + $0x68] sm:$0xf]
    %v132 = vld [vmem:[#allocation5 + $0x6c] sm:$0xf]
    %v133 = vld [vmem:[#allocation5 + $0x70] sm:$0xf]
    %v134 = vld [vmem:[#allocation5 + $0x74] sm:$0xf]
    %v135 = vld [vmem:[#allocation5 + $0x78] sm:$0xf]
    %v136 = vld [vmem:[#allocation5 + $0x7c] sm:$0xf]
    %v201 = vunpack.c.l.b16 %v41
    %v202 = vunpack.c.h.b16 %v41
    %v203 = vunpack.c.l.b16 %v42
    %v204 = vunpack.c.h.b16 %v42
    %v205 = vunpack.c.l.b16 %v43
    %v206 = vunpack.c.h.b16 %v43
    %v207 = vunpack.c.l.b16 %v44
    %v208 = vunpack.c.h.b16 %v44
    %v209 = vunpack.c.l.b16 %v45
    %v210 = vunpack.c.h.b16 %v45
    %v211 = vunpack.c.l.b16 %v46
    %v212 = vunpack.c.h.b16 %v46
    %v213 = vunpack.c.l.b16 %v47
    %v214 = vunpack.c.h.b16 %v47
    %v215 = vunpack.c.l.b16 %v48
    %v216 = vunpack.c.h.b16 %v48
    %v217 = vunpack.c.l.b16 %v49
    %v218 = vunpack.c.h.b16 %v49
    %v219 = vunpack.c.l.b16 %v50
    %v220 = vunpack.c.h.b16 %v50
    %v221 = vunpack.c.l.b16 %v51
    %v222 = vunpack.c.h.b16 %v51
    %v223 = vunpack.c.l.b16 %v52
    %v224 = vunpack.c.h.b16 %v52
    %v225 = vunpack.c.l.b16 %v53
    %v226 = vunpack.c.h.b16 %v53
    %v227 = vunpack.c.l.b16 %v54
    %v228 = vunpack.c.h.b16 %v54
    %v229 = vunpack.c.l.b16 %v55
    %v230 = vunpack.c.h.b16 %v55
    %v231 = vunpack.c.l.b16 %v56
    %v232 = vunpack.c.h.b16 %v56
    %v233 = vunpack.c.l.b16 %v57
    %v234 = vunpack.c.h.b16 %v57
    %v235 = vunpack.c.l.b16 %v58
    %v236 = vunpack.c.h.b16 %v58
    %v237 = vunpack.c.l.b16 %v59
    %v238 = vunpack.c.h.b16 %v59
    %v239 = vunpack.c.l.b16 %v60
    %v240 = vunpack.c.h.b16 %v60
    %v241 = vunpack.c.l.b16 %v61
    %v242 = vunpack.c.h.b16 %v61
    %v243 = vunpack.c.l.b16 %v62
    %v244 = vunpack.c.h.b16 %v62
    %v245 = vunpack.c.l.b16 %v63
    %v246 = vunpack.c.h.b16 %v63
    %v247 = vunpack.c.l.b16 %v64
    %v248 = vunpack.c.h.b16 %v64
    %v249 = vunpack.c.l.b16 %v65
    %v250 = vunpack.c.h.b16 %v65
    %v251 = vunpack.c.l.b16 %v66
    %v252 = vunpack.c.h.b16 %v66
    %v253 = vunpack.c.l.b16 %v67
    %v254 = vunpack.c.h.b16 %v67
    %v255 = vunpack.c.l.b16 %v68
    %v256 = vunpack.c.h.b16 %v68
    %v257 = vunpack.c.l.b16 %v69
    %v258 = vunpack.c.h.b16 %v69
    %v259 = vunpack.c.l.b16 %v70
    %v260 = vunpack.c.h.b16 %v70
    %v261 = vunpack.c.l.b16 %v71
    %v262 = vunpack.c.h.b16 %v71
    %v263 = vunpack.c.l.b16 %v72
    %v264 = vunpack.c.h.b16 %v72
    %v265 = vunpack.c.l.b16 %v73
    %v266 = vunpack.c.h.b16 %v73
    %v267 = vunpack.c.l.b16 %v74
    %v268 = vunpack.c.h.b16 %v74
    %v269 = vunpack.c.l.b16 %v75
    %v270 = vunpack.c.h.b16 %v75
    %v271 = vunpack.c.l.b16 %v76
    %v272 = vunpack.c.h.b16 %v76
    %v273 = vunpack.c.l.b16 %v77
    %v274 = vunpack.c.h.b16 %v77
    %v275 = vunpack.c.l.b16 %v78
    %v276 = vunpack.c.h.b16 %v78
    %v277 = vunpack.c.l.b16 %v79
    %v278 = vunpack.c.h.b16 %v79
    %v279 = vunpack.c.l.b16 %v80
    %v280 = vunpack.c.h.b16 %v80
    %v281 = vunpack.c.l.b16 %v81
    %v282 = vunpack.c.h.b16 %v81
    %v283 = vunpack.c.l.b16 %v82
    %v284 = vunpack.c.h.b16 %v82
    %v285 = vunpack.c.l.b16 %v83
    %v286 = vunpack.c.h.b16 %v83
    %v287 = vunpack.c.l.b16 %v84
    %v288 = vunpack.c.h.b16 %v84
    %v289 = vunpack.c.l.b16 %v85
    %v290 = vunpack.c.h.b16 %v85
    %v291 = vunpack.c.l.b16 %v86
    %v292 = vunpack.c.h.b16 %v86
    %v293 = vunpack.c.l.b16 %v87
    %v294 = vunpack.c.h.b16 %v87
    %v295 = vunpack.c.l.b16 %v88
    %v296 = vunpack.c.h.b16 %v88
    %v297 = vunpack.c.l.b16 %v89
    %v298 = vunpack.c.h.b16 %v89
    %v299 = vunpack.c.l.b16 %v90
    %v300 = vunpack.c.h.b16 %v90
    %v301 = vunpack.c.l.b16 %v91
    %v302 = vunpack.c.h.b16 %v91
    %v303 = vunpack.c.l.b16 %v92
    %v304 = vunpack.c.h.b16 %v92
    %v305 = vunpack.c.l.b16 %v93
    %v306 = vunpack.c.h.b16 %v93
    %v307 = vunpack.c.l.b16 %v94
    %v308 = vunpack.c.h.b16 %v94
    %v309 = vunpack.c.l.b16 %v95
    %v310 = vunpack.c.h.b16 %v95
    %v311 = vunpack.c.l.b16 %v96
    %v312 = vunpack.c.h.b16 %v96
    %v313 = vunpack.c.l.b16 %v97
    %v314 = vunpack.c.h.b16 %v97
    %v315 = vunpack.c.l.b16 %v98
    %v316 = vunpack.c.h.b16 %v98
    %v317 = vunpack.c.l.b16 %v99
    %v318 = vunpack.c.h.b16 %v99
    %v319 = vunpack.c.l.b16 %v100
    %v320 = vunpack.c.h.b16 %v100
    %v321 = vunpack.c.l.b16 %v101
    %v322 = vunpack.c.h.b16 %v101
    %v323 = vunpack.c.l.b16 %v102
    %v324 = vunpack.c.h.b16 %v102
    %v325 = vunpack.c.l.b16 %v103
    %v326 = vunpack.c.h.b16 %v103
    %v327 = vunpack.c.l.b16 %v104
    %v328 = vunpack.c.h.b16 %v104
    %v329 = vpack.c.b16 %v203, %v201
    %v330 = vpack.c.b16 %v204, %v202
    %v331 = vpack.c.b16 %v207, %v205
    %v332 = vpack.c.b16 %v208, %v206
    %v333 = vpack.c.b16 %v211, %v209
    %v334 = vpack.c.b16 %v212, %v210
    %v335 = vpack.c.b16 %v215, %v213
    %v336 = vpack.c.b16 %v216, %v214
    %v337 = vpack.c.b16 %v219, %v217
    %v338 = vpack.c.b16 %v220, %v218
    %v339 = vpack.c.b16 %v223, %v221
    %v340 = vpack.c.b16 %v224, %v222
    %v341 = vpack.c.b16 %v227, %v225
    %v342 = vpack.c.b16 %v228, %v226
    %v343 = vpack.c.b16 %v231, %v229
    %v344 = vpack.c.b16 %v232, %v230
    %v345 = vpack.c.b16 %v235, %v233
    %v346 = vpack.c.b16 %v236, %v234
    %v347 = vpack.c.b16 %v239, %v237
    %v348 = vpack.c.b16 %v240, %v238
    %v349 = vpack.c.b16 %v243, %v241
    %v350 = vpack.c.b16 %v244, %v242
    %v351 = vpack.c.b16 %v247, %v245
    %v352 = vpack.c.b16 %v248, %v246
    %v353 = vpack.c.b16 %v251, %v249
    %v354 = vpack.c.b16 %v252, %v250
    %v355 = vpack.c.b16 %v255, %v253
    %v356 = vpack.c.b16 %v256, %v254
    %v357 = vpack.c.b16 %v259, %v257
    %v358 = vpack.c.b16 %v260, %v258
    %v359 = vpack.c.b16 %v263, %v261
    %v360 = vpack.c.b16 %v264, %v262
    %v361 = vpack.c.b16 %v267, %v265
    %v362 = vpack.c.b16 %v268, %v266
    %v363 = vpack.c.b16 %v271, %v269
    %v364 = vpack.c.b16 %v272, %v270
    %v365 = vpack.c.b16 %v275, %v273
    %v366 = vpack.c.b16 %v276, %v274
    %v367 = vpack.c.b16 %v279, %v277
    %v368 = vpack.c.b16 %v280, %v278
    %v369 = vpack.c.b16 %v283, %v281
    %v370 = vpack.c.b16 %v284, %v282
    %v371 = vpack.c.b16 %v287, %v285
    %v372 = vpack.c.b16 %v288, %v286
    %v373 = vpack.c.b16 %v291, %v289
    %v374 = vpack.c.b16 %v292, %v290
    %v375 = vpack.c.b16 %v295, %v293
    %v376 = vpack.c.b16 %v296, %v294
    %v377 = vpack.c.b16 %v299, %v297
    %v378 = vpack.c.b16 %v300, %v298
    %v379 = vpack.c.b16 %v303, %v301
    %v380 = vpack.c.b16 %v304, %v302
    %v381 = vpack.c.b16 %v307, %v305
    %v382 = vpack.c.b16 %v308, %v306
    %v383 = vpack.c.b16 %v311, %v309
    %v384 = vpack.c.b16 %v312, %v310
    %v385 = vpack.c.b16 %v315, %v313
    %v386 = vpack.c.b16 %v316, %v314
    %v387 = vpack.c.b16 %v319, %v317
    %v388 = vpack.c.b16 %v320, %v318
    %v389 = vpack.c.b16 %v323, %v321
    %v390 = vpack.c.b16 %v324, %v322
    %v391 = vpack.c.b16 %v327, %v325
    %v392 = vpack.c.b16 %v328, %v326
    %v489 = vunpack.c.l.b16 %v105
    %v490 = vunpack.c.l.b16 %v106
    %v491 = vunpack.c.l.b16 %v107
    %v492 = vunpack.c.l.b16 %v108
    %v493 = vunpack.c.l.b16 %v109
    %v494 = vunpack.c.l.b16 %v110
    %v495 = vunpack.c.l.b16 %v111
    %v496 = vunpack.c.l.b16 %v112
    %v497 = vunpack.c.l.b16 %v113
    %v498 = vunpack.c.l.b16 %v114
    %v499 = vunpack.c.l.b16 %v115
    %v500 = vunpack.c.l.b16 %v116
    %v501 = vunpack.c.l.b16 %v117
    %v502 = vunpack.c.l.b16 %v118
    %v503 = vunpack.c.l.b16 %v119
    %v504 = vunpack.c.l.b16 %v120
    %v505 = vunpack.c.l.b16 %v121
    %v506 = vunpack.c.l.b16 %v122
    %v507 = vunpack.c.l.b16 %v123
    %v508 = vunpack.c.l.b16 %v124
    %v509 = vunpack.c.l.b16 %v125
    %v510 = vunpack.c.l.b16 %v126
    %v511 = vunpack.c.l.b16 %v127
    %v512 = vunpack.c.l.b16 %v128
    %v513 = vunpack.c.l.b16 %v129
    %v514 = vunpack.c.l.b16 %v130
    %v515 = vunpack.c.l.b16 %v131
    %v516 = vunpack.c.l.b16 %v132
    %v517 = vunpack.c.l.b16 %v133
    %v518 = vunpack.c.l.b16 %v134
    %v519 = vunpack.c.l.b16 %v135
    %v520 = vunpack.c.l.b16 %v136
    %v521 = vpack.c.b16 %v490, %v489
    %v522 = vpack.c.b16 %v492, %v491
    %v523 = vpack.c.b16 %v494, %v493
    %v524 = vpack.c.b16 %v496, %v495
    %v525 = vpack.c.b16 %v498, %v497
    %v526 = vpack.c.b16 %v500, %v499
    %v527 = vpack.c.b16 %v502, %v501
    %v528 = vpack.c.b16 %v504, %v503
    %v529 = vpack.c.b16 %v506, %v505
    %v530 = vpack.c.b16 %v508, %v507
    %v531 = vpack.c.b16 %v510, %v509
    %v532 = vpack.c.b16 %v512, %v511
    %v533 = vpack.c.b16 %v514, %v513
    %v534 = vpack.c.b16 %v516, %v515
    %v535 = vpack.c.b16 %v518, %v517
    %v536 = vpack.c.b16 %v520, %v519
    %553 = vmatprep.subr.bf16.mxu0 0
    %554 = vmatpush1.bf16.msra.mxu0 %v528
    %555 = vmatprep.subr.bf16.mxu0 0
    %556 = vmatpush1.bf16.msra.mxu0 %v527
    %557 = vmatprep.subr.bf16.mxu0 0
    %558 = vmatpush1.bf16.msra.mxu0 %v526
    %559 = vmatprep.subr.bf16.mxu0 0
    %560 = vmatpush1.bf16.msra.mxu0 %v525
    %561 = vmatprep.subr.bf16.mxu0 0
    %562 = vmatpush1.bf16.msra.mxu0 %v524
    %563 = vmatprep.subr.bf16.mxu0 0
    %564 = vmatpush1.bf16.msra.mxu0 %v523
    %565 = vmatprep.subr.bf16.mxu0 0
    %566 = vmatpush1.bf16.msra.mxu0 %v522
    %567 = vmatprep.subr.bf16.mxu0 0
    %568 = vmatpush1.bf16.msra.mxu0 %v521
    %569 = vmatprep.subr.bf16.mxu0 0
    %570 = vmatpush2.bf16.msra.mxu0 %v536
    %571 = vmatprep.subr.bf16.mxu0 0
    %572 = vmatpush2.bf16.msra.mxu0 %v535
    %573 = vmatprep.subr.bf16.mxu0 0
    %574 = vmatpush2.bf16.msra.mxu0 %v534
    %575 = vmatprep.subr.bf16.mxu0 0
    %576 = vmatpush2.bf16.msra.mxu0 %v533
    %577 = vmatprep.subr.bf16.mxu0 0
    %578 = vmatpush2.bf16.msra.mxu0 %v532
    %579 = vmatprep.subr.bf16.mxu0 0
    %580 = vmatpush2.bf16.msra.mxu0 %v531
    %581 = vmatprep.subr.bf16.mxu0 0
    %582 = vmatpush2.bf16.msra.mxu0 %v530
    %583 = vmatprep.subr.bf16.mxu0 0
    %584 = vmatpush2.bf16.msra.mxu0 %v529
    %585 = vmatprep.mubr.bf16.mxu0 %v330
    %586 = vmatmul.mubr.bf16.gmra.mxu0 %v329
    %v587 = vpop.f32.mrf.mxu0
    %v588 = vadd.f32 0.0, %v587
    %v589 = vpop.f32.mrf.mxu0
    %v590 = vpop.f32.mrf.mxu0
    %v591 = vadd.f32 0.0, %v590
    %v592 = vpop.f32.mrf.mxu0
    %593 = vmatprep.mubr.bf16.mxu0 %v332
    %594 = vmatmul.mubr.bf16.gmra.mxu0 %v331
    %v595 = vpop.f32.mrf.mxu0
    %v596 = vadd.f32 0.0, %v595
    %v597 = vpop.f32.mrf.mxu0
    %v598 = vpop.f32.mrf.mxu0
    %v599 = vadd.f32 0.0, %v598
    %v600 = vpop.f32.mrf.mxu0
    %601 = vmatprep.mubr.bf16.mxu0 %v334
    %602 = vmatmul.mubr.bf16.gmra.mxu0 %v333
    %v603 = vpop.f32.mrf.mxu0
    %v604 = vadd.f32 0.0, %v603
    %v605 = vpop.f32.mrf.mxu0
    %v606 = vpop.f32.mrf.mxu0
    %v607 = vadd.f32 0.0, %v606
    %v608 = vpop.f32.mrf.mxu0
    %609 = vmatprep.mubr.bf16.mxu0 %v336
    %610 = vmatmul.mubr.bf16.gmra.mxu0 %v335
    %v611 = vpop.f32.mrf.mxu0
    %v612 = vadd.f32 0.0, %v611
    %v613 = vpop.f32.mrf.mxu0
    %v614 = vpop.f32.mrf.mxu0
    %v615 = vadd.f32 0.0, %v614
    %v616 = vpop.f32.mrf.mxu0
    %617 = vmatprep.mubr.bf16.mxu0 %v338
    %618 = vmatmul.mubr.bf16.gmra.mxu0 %v337
    %v619 = vpop.f32.mrf.mxu0
    %v620 = vadd.f32 0.0, %v619
    %v621 = vpop.f32.mrf.mxu0
    %v622 = vpop.f32.mrf.mxu0
    %v623 = vadd.f32 0.0, %v622
    %v624 = vpop.f32.mrf.mxu0
    %625 = vmatprep.mubr.bf16.mxu0 %v340
    %626 = vmatmul.mubr.bf16.gmra.mxu0 %v339
    %v627 = vpop.f32.mrf.mxu0
    %v628 = vadd.f32 0.0, %v627
    %v629 = vpop.f32.mrf.mxu0
    %v630 = vpop.f32.mrf.mxu0
    %v631 = vadd.f32 0.0, %v630
    %v632 = vpop.f32.mrf.mxu0
    %633 = vmatprep.mubr.bf16.mxu0 %v342
    %634 = vmatmul.mubr.bf16.gmra.mxu0 %v341
    %v635 = vpop.f32.mrf.mxu0
    %v636 = vadd.f32 0.0, %v635
    %v637 = vpop.f32.mrf.mxu0
    %v638 = vpop.f32.mrf.mxu0
    %v639 = vadd.f32 0.0, %v638
    %v640 = vpop.f32.mrf.mxu0
    %641 = vmatprep.mubr.bf16.mxu0 %v344
    %642 = vmatmul.mubr.bf16.gmra.mxu0 %v343
    %v643 = vpop.f32.mrf.mxu0
    %v644 = vadd.f32 0.0, %v643
    %v645 = vpop.f32.mrf.mxu0
    %v646 = vpop.f32.mrf.mxu0
    %v647 = vadd.f32 0.0, %v646
    %v648 = vpop.f32.mrf.mxu0
    %649 = vmatprep.mubr.bf16.mxu0 %v346
    %650 = vmatmul.mubr.bf16.gmra.mxu0 %v345
    %v651 = vpop.f32.mrf.mxu0
    %v652 = vadd.f32 0.0, %v651
    %v653 = vpop.f32.mrf.mxu0
    %v654 = vpop.f32.mrf.mxu0
    %v655 = vadd.f32 0.0, %v654
    %v656 = vpop.f32.mrf.mxu0
    %657 = vmatprep.mubr.bf16.mxu0 %v348
    %658 = vmatmul.mubr.bf16.gmra.mxu0 %v347
    %v659 = vpop.f32.mrf.mxu0
    %v660 = vadd.f32 0.0, %v659
    %v661 = vpop.f32.mrf.mxu0
    %v662 = vpop.f32.mrf.mxu0
    %v663 = vadd.f32 0.0, %v662
    %v664 = vpop.f32.mrf.mxu0
    %665 = vmatprep.mubr.bf16.mxu0 %v350
    %666 = vmatmul.mubr.bf16.gmra.mxu0 %v349
    %v667 = vpop.f32.mrf.mxu0
    %v668 = vadd.f32 0.0, %v667
    %v669 = vpop.f32.mrf.mxu0
    %v670 = vpop.f32.mrf.mxu0
    %v671 = vadd.f32 0.0, %v670
    %v672 = vpop.f32.mrf.mxu0
    %673 = vmatprep.mubr.bf16.mxu0 %v352
    %674 = vmatmul.mubr.bf16.gmra.mxu0 %v351
    %v675 = vpop.f32.mrf.mxu0
    %v676 = vadd.f32 0.0, %v675
    %v677 = vpop.f32.mrf.mxu0
    %v678 = vpop.f32.mrf.mxu0
    %v679 = vadd.f32 0.0, %v678
    %v680 = vpop.f32.mrf.mxu0
    %681 = vmatprep.mubr.bf16.mxu0 %v354
    %682 = vmatmul.mubr.bf16.gmra.mxu0 %v353
    %v683 = vpop.f32.mrf.mxu0
    %v684 = vadd.f32 0.0, %v683
    %v685 = vpop.f32.mrf.mxu0
    %v686 = vpop.f32.mrf.mxu0
    %v687 = vadd.f32 0.0, %v686
    %v688 = vpop.f32.mrf.mxu0
    %689 = vmatprep.mubr.bf16.mxu0 %v356
    %690 = vmatmul.mubr.bf16.gmra.mxu0 %v355
    %v691 = vpop.f32.mrf.mxu0
    %v692 = vadd.f32 0.0, %v691
    %v693 = vpop.f32.mrf.mxu0
    %v694 = vpop.f32.mrf.mxu0
    %v695 = vadd.f32 0.0, %v694
    %v696 = vpop.f32.mrf.mxu0
    %697 = vmatprep.mubr.bf16.mxu0 %v358
    %698 = vmatmul.mubr.bf16.gmra.mxu0 %v357
    %v699 = vpop.f32.mrf.mxu0
    %v700 = vadd.f32 0.0, %v699
    %v701 = vpop.f32.mrf.mxu0
    %v702 = vpop.f32.mrf.mxu0
    %v703 = vadd.f32 0.0, %v702
    %v704 = vpop.f32.mrf.mxu0
    %705 = vmatprep.mubr.bf16.mxu0 %v360
    %706 = vmatmul.mubr.bf16.gmra.mxu0 %v359
    %v707 = vpop.f32.mrf.mxu0
    %v708 = vadd.f32 0.0, %v707
    %v709 = vpop.f32.mrf.mxu0
    %v710 = vpop.f32.mrf.mxu0
    %v711 = vadd.f32 0.0, %v710
    %v712 = vpop.f32.mrf.mxu0
    %713 = vmatprep.mubr.bf16.mxu0 %v362
    %714 = vmatmul.mubr.bf16.gmra.mxu0 %v361
    %v715 = vpop.f32.mrf.mxu0
    %v716 = vadd.f32 0.0, %v715
    %v717 = vpop.f32.mrf.mxu0
    %v718 = vpop.f32.mrf.mxu0
    %v719 = vadd.f32 0.0, %v718
    %v720 = vpop.f32.mrf.mxu0
    %721 = vmatprep.mubr.bf16.mxu0 %v364
    %722 = vmatmul.mubr.bf16.gmra.mxu0 %v363
    %v723 = vpop.f32.mrf.mxu0
    %v724 = vadd.f32 0.0, %v723
    %v725 = vpop.f32.mrf.mxu0
    %v726 = vpop.f32.mrf.mxu0
    %v727 = vadd.f32 0.0, %v726
    %v728 = vpop.f32.mrf.mxu0
    %729 = vmatprep.mubr.bf16.mxu0 %v366
    %730 = vmatmul.mubr.bf16.gmra.mxu0 %v365
    %v731 = vpop.f32.mrf.mxu0
    %v732 = vadd.f32 0.0, %v731
    %v733 = vpop.f32.mrf.mxu0
    %v734 = vpop.f32.mrf.mxu0
    %v735 = vadd.f32 0.0, %v734
    %v736 = vpop.f32.mrf.mxu0
    %737 = vmatprep.mubr.bf16.mxu0 %v368
    %738 = vmatmul.mubr.bf16.gmra.mxu0 %v367
    %v739 = vpop.f32.mrf.mxu0
    %v740 = vadd.f32 0.0, %v739
    %v741 = vpop.f32.mrf.mxu0
    %v742 = vpop.f32.mrf.mxu0
    %v743 = vadd.f32 0.0, %v742
    %v744 = vpop.f32.mrf.mxu0
    %745 = vmatprep.mubr.bf16.mxu0 %v370
    %746 = vmatmul.mubr.bf16.gmra.mxu0 %v369
    %v747 = vpop.f32.mrf.mxu0
    %v748 = vadd.f32 0.0, %v747
    %v749 = vpop.f32.mrf.mxu0
    %v750 = vpop.f32.mrf.mxu0
    %v751 = vadd.f32 0.0, %v750
    %v752 = vpop.f32.mrf.mxu0
    %753 = vmatprep.mubr.bf16.mxu0 %v372
    %754 = vmatmul.mubr.bf16.gmra.mxu0 %v371
    %v755 = vpop.f32.mrf.mxu0
    %v756 = vadd.f32 0.0, %v755
    %v757 = vpop.f32.mrf.mxu0
    %v758 = vpop.f32.mrf.mxu0
    %v759 = vadd.f32 0.0, %v758
    %v760 = vpop.f32.mrf.mxu0
    %761 = vmatprep.mubr.bf16.mxu0 %v374
    %762 = vmatmul.mubr.bf16.gmra.mxu0 %v373
    %v763 = vpop.f32.mrf.mxu0
    %v764 = vadd.f32 0.0, %v763
    %v765 = vpop.f32.mrf.mxu0
    %v766 = vpop.f32.mrf.mxu0
    %v767 = vadd.f32 0.0, %v766
    %v768 = vpop.f32.mrf.mxu0
    %769 = vmatprep.mubr.bf16.mxu0 %v376
    %770 = vmatmul.mubr.bf16.gmra.mxu0 %v375
    %v771 = vpop.f32.mrf.mxu0
    %v772 = vadd.f32 0.0, %v771
    %v773 = vpop.f32.mrf.mxu0
    %v774 = vpop.f32.mrf.mxu0
    %v775 = vadd.f32 0.0, %v774
    %v776 = vpop.f32.mrf.mxu0
    %777 = vmatprep.mubr.bf16.mxu0 %v378
    %778 = vmatmul.mubr.bf16.gmra.mxu0 %v377
    %v779 = vpop.f32.mrf.mxu0
    %v780 = vadd.f32 0.0, %v779
    %v781 = vpop.f32.mrf.mxu0
    %v782 = vpop.f32.mrf.mxu0
    %v783 = vadd.f32 0.0, %v782
    %v784 = vpop.f32.mrf.mxu0
    %785 = vmatprep.mubr.bf16.mxu0 %v380
    %786 = vmatmul.mubr.bf16.gmra.mxu0 %v379
    %v787 = vpop.f32.mrf.mxu0
    %v788 = vadd.f32 0.0, %v787
    %v789 = vpop.f32.mrf.mxu0
    %v790 = vpop.f32.mrf.mxu0
    %v791 = vadd.f32 0.0, %v790
    %v792 = vpop.f32.mrf.mxu0
    %793 = vmatprep.mubr.bf16.mxu0 %v382
    %794 = vmatmul.mubr.bf16.gmra.mxu0 %v381
    %v795 = vpop.f32.mrf.mxu0
    %v796 = vadd.f32 0.0, %v795
    %v797 = vpop.f32.mrf.mxu0
    %v798 = vpop.f32.mrf.mxu0
    %v799 = vadd.f32 0.0, %v798
    %v800 = vpop.f32.mrf.mxu0
    %801 = vmatprep.mubr.bf16.mxu0 %v384
    %802 = vmatmul.mubr.bf16.gmra.mxu0 %v383
    %v803 = vpop.f32.mrf.mxu0
    %v804 = vadd.f32 0.0, %v803
    %v805 = vpop.f32.mrf.mxu0
    %v806 = vpop.f32.mrf.mxu0
    %v807 = vadd.f32 0.0, %v806
    %v808 = vpop.f32.mrf.mxu0
    %809 = vmatprep.mubr.bf16.mxu0 %v386
    %810 = vmatmul.mubr.bf16.gmra.mxu0 %v385
    %v811 = vpop.f32.mrf.mxu0
    %v812 = vadd.f32 0.0, %v811
    %v813 = vpop.f32.mrf.mxu0
    %v814 = vpop.f32.mrf.mxu0
    %v815 = vadd.f32 0.0, %v814
    %v816 = vpop.f32.mrf.mxu0
    %817 = vmatprep.mubr.bf16.mxu0 %v388
    %818 = vmatmul.mubr.bf16.gmra.mxu0 %v387
    %v819 = vpop.f32.mrf.mxu0
    %v820 = vadd.f32 0.0, %v819
    %v821 = vpop.f32.mrf.mxu0
    %v822 = vpop.f32.mrf.mxu0
    %v823 = vadd.f32 0.0, %v822
    %v824 = vpop.f32.mrf.mxu0
    %825 = vmatprep.mubr.bf16.mxu0 %v390
    %826 = vmatmul.mubr.bf16.gmra.mxu0 %v389
    %v827 = vpop.f32.mrf.mxu0
    %v828 = vadd.f32 0.0, %v827
    %v829 = vpop.f32.mrf.mxu0
    %v830 = vpop.f32.mrf.mxu0
    %v831 = vadd.f32 0.0, %v830
    %v832 = vpop.f32.mrf.mxu0
    %833 = vmatprep.mubr.bf16.mxu0 %v392
    %834 = vmatmul.mubr.bf16.gmra.mxu0 %v391
    %v835 = vpop.f32.mrf.mxu0
    %v836 = vadd.f32 0.0, %v835
    %v837 = vpop.f32.mrf.mxu0
    %v838 = vpop.f32.mrf.mxu0
    %v839 = vadd.f32 0.0, %v838
    %v840 = vpop.f32.mrf.mxu0
    %841 = vdwg.mxu0
    %842 = vst [vmem:[#allocation7] sm:$0xff] %v588
    %843 = vst [vmem:[#allocation7 + $0x8] sm:$0xff] %v591
    %844 = vst [vmem:[#allocation7 + $0x10] sm:$0xff] %v596
    %845 = vst [vmem:[#allocation7 + $0x18] sm:$0xff] %v599
    %846 = vst [vmem:[#allocation7 + $0x20] sm:$0xff] %v604
    %847 = vst [vmem:[#allocation7 + $0x28] sm:$0xff] %v607
    %848 = vst [vmem:[#allocation7 + $0x30] sm:$0xff] %v612
    %849 = vst [vmem:[#allocation7 + $0x38] sm:$0xff] %v615
    %850 = vst [vmem:[#allocation7 + $0x40] sm:$0xff] %v620
    %851 = vst [vmem:[#allocation7 + $0x48] sm:$0xff] %v623
    %852 = vst [vmem:[#allocation7 + $0x50] sm:$0xff] %v628
    %853 = vst [vmem:[#allocation7 + $0x58] sm:$0xff] %v631
    %854 = vst [vmem:[#allocation7 + $0x60] sm:$0xff] %v636
    %855 = vst [vmem:[#allocation7 + $0x68] sm:$0xff] %v639
    %856 = vst [vmem:[#allocation7 + $0x70] sm:$0xff] %v644
    %857 = vst [vmem:[#allocation7 + $0x78] sm:$0xff] %v647
    %858 = vst [vmem:[#allocation7 + $0x80] sm:$0xff] %v652
    %859 = vst [vmem:[#allocation7 + $0x88] sm:$0xff] %v655
    %860 = vst [vmem:[#allocation7 + $0x90] sm:$0xff] %v660
    %861 = vst [vmem:[#allocation7 + $0x98] sm:$0xff] %v663
    %862 = vst [vmem:[#allocation7 + $0xa0] sm:$0xff] %v668
    %863 = vst [vmem:[#allocation7 + $0xa8] sm:$0xff] %v671
    %864 = vst [vmem:[#allocation7 + $0xb0] sm:$0xff] %v676
    %865 = vst [vmem:[#allocation7 + $0xb8] sm:$0xff] %v679
    %866 = vst [vmem:[#allocation7 + $0xc0] sm:$0xff] %v684
    %867 = vst [vmem:[#allocation7 + $0xc8] sm:$0xff] %v687
    %868 = vst [vmem:[#allocation7 + $0xd0] sm:$0xff] %v692
    %869 = vst [vmem:[#allocation7 + $0xd8] sm:$0xff] %v695
    %870 = vst [vmem:[#allocation7 + $0xe0] sm:$0xff] %v700
    %871 = vst [vmem:[#allocation7 + $0xe8] sm:$0xff] %v703
    %872 = vst [vmem:[#allocation7 + $0xf0] sm:$0xff] %v708
    %873 = vst [vmem:[#allocation7 + $0xf8] sm:$0xff] %v711
    %874 = vst [vmem:[#allocation7 + $0x100] sm:$0xff] %v716
    %875 = vst [vmem:[#allocation7 + $0x108] sm:$0xff] %v719
    %876 = vst [vmem:[#allocation7 + $0x110] sm:$0xff] %v724
    %877 = vst [vmem:[#allocation7 + $0x118] sm:$0xff] %v727
    %878 = vst [vmem:[#allocation7 + $0x120] sm:$0xff] %v732
    %879 = vst [vmem:[#allocation7 + $0x128] sm:$0xff] %v735
    %880 = vst [vmem:[#allocation7 + $0x130] sm:$0xff] %v740
    %881 = vst [vmem:[#allocation7 + $0x138] sm:$0xff] %v743
    %882 = vst [vmem:[#allocation7 + $0x140] sm:$0xff] %v748
    %883 = vst [vmem:[#allocation7 + $0x148] sm:$0xff] %v751
    %884 = vst [vmem:[#allocation7 + $0x150] sm:$0xff] %v756
    %885 = vst [vmem:[#allocation7 + $0x158] sm:$0xff] %v759
    %886 = vst [vmem:[#allocation7 + $0x160] sm:$0xff] %v764
    %887 = vst [vmem:[#allocation7 + $0x168] sm:$0xff] %v767
    %888 = vst [vmem:[#allocation7 + $0x170] sm:$0xff] %v772
    %889 = vst [vmem:[#allocation7 + $0x178] sm:$0xff] %v775
    %890 = vst [vmem:[#allocation7 + $0x180] sm:$0xff] %v780
    %891 = vst [vmem:[#allocation7 + $0x188] sm:$0xff] %v783
    %892 = vst [vmem:[#allocation7 + $0x190] sm:$0xff] %v788
    %893 = vst [vmem:[#allocation7 + $0x198] sm:$0xff] %v791
    %894 = vst [vmem:[#allocation7 + $0x1a0] sm:$0xff] %v796
    %895 = vst [vmem:[#allocation7 + $0x1a8] sm:$0xff] %v799
    %896 = vst [vmem:[#allocation7 + $0x1b0] sm:$0xff] %v804
    %897 = vst [vmem:[#allocation7 + $0x1b8] sm:$0xff] %v807
    %898 = vst [vmem:[#allocation7 + $0x1c0] sm:$0xff] %v812
    %899 = vst [vmem:[#allocation7 + $0x1c8] sm:$0xff] %v815
    %900 = vst [vmem:[#allocation7 + $0x1d0] sm:$0xff] %v820
    %901 = vst [vmem:[#allocation7 + $0x1d8] sm:$0xff] %v823
    %902 = vst [vmem:[#allocation7 + $0x1e0] sm:$0xff] %v828
    %903 = vst [vmem:[#allocation7 + $0x1e8] sm:$0xff] %v831
    %904 = vst [vmem:[#allocation7 + $0x1f0] sm:$0xff] %v836
    %905 = vst [vmem:[#allocation7 + $0x1f8] sm:$0xff] %v839
    // Predicated region
    $region18: #{tpu_custom_call.1} parent=1 // pred_check
      _
    $region19: #{tpu_custom_call.1} parent=1 // pred_check_branch
      %907 = sbr.rel (0) target = $region21
    $region20: #{tpu_custom_call.1} parent=1 // pred_region
      %s909 = ssub.s32 8192, 8192
      %910 = vsyncadd [#allocation4], %s909
      %s911 = sshll.u32 [#allocation7], 4
      %s912 = int_to_ptr.vmem [resolvable:$true] %s911
      %917 = dma.vmem_to_hbm [thread:$0]  %s912, 8192, %s2, [#allocation4], 128, 128, 8
    $region21: #{tpu_custom_call.1} parent=1 // pred_fallthru
      _
    // Predicated region
    $region22: #{tpu_custom_call.1} parent=1 // pred_check
      _
    $region23: #{tpu_custom_call.1} parent=1 // pred_check_branch
      %919 = sbr.rel (0) target = $region25
    $region24: #{tpu_custom_call.1} parent=1 // pred_region
      %920 = dma.done [#allocation4], 8192
    $region25: #{tpu_custom_call.1} parent=1 // pred_fallthru
      _
    %921 = vsyncpa [#allocation3], 1
    %922 = vsyncpa [#allocation6], 1
    %923 = vsyncpa [#allocation4], 1

</llo_original>
